<compile_context>
chip_gen: v7x
topology: tpu7x:2x2x1
jax: 0.10.0
libtpu: 0.0.40
codegen_flags: <defaults>
</compile_context>

<pallas_src>
import jax
import jax.numpy as jnp
from jax import lax
from jax.experimental import pallas as pl
from jax.experimental.pallas import tpu as pltpu


def input_layer_kernel(x_ref, w_ref, scale_ref, shift_ref, o_ref):
    # x_ref:     (1, K, L)    bf16  K = 4*Cin pre-packed taps (sublanes), L spatial (lanes)
    # w_ref:     (Cout, K)    bf16  conv weights, k = (di*2+dj)*Cin + ci
    # scale_ref: (Cout, 1)    f32   BN scale = gamma / sqrt(var + eps)
    # shift_ref: (Cout, 1)    f32   BN shift = beta + (bias - mean) * scale
    # o_ref:     (1, Cout, L) bf16  lane-dense output slab
    acc = lax.dot_general(w_ref[...], x_ref[0],
                          (((1,), (0,)), ((), ())),
                          preferred_element_type=jnp.float32)        # (Cout, L) f32
    y = jnp.maximum(acc * scale_ref[...] + shift_ref[...], 0.0)      # BN + ReLU in f32
    o_ref[0] = y.astype(o_ref.dtype)


def _divisors(n):
    ds = set()
    i = 1
    while i * i <= n:
        if n % i == 0:
            ds.add(i)
            ds.add(n // i)
        i += 1
    return sorted(ds, reverse=True)


def _vmem_block_budget():
    """Conservative, generation-aware budget (bytes) for the double-buffered blocks."""
    cap = 64 * 1024 * 1024                      # assume the smallest (v7x: 64 MiB per TC)
    try:
        cap = pltpu.get_tpu_info().vmem_capacity_bytes
    except Exception:                           # query unavailable -> keep conservative cap
        pass
    return max(16 * 1024 * 1024, min(cap // 4, 40 * 1024 * 1024))


def _pick_spatial_tile(hw, n_batch, bytes_per_lane, budget_bytes):
    """Largest divisor L of hw that is lane-dense, fits the VMEM budget, and (if possible)
    keeps >= 2 total grid steps so both v7x TensorCores get work."""
    max_l = max(128, budget_bytes // max(bytes_per_lane, 1))
    divs = _divisors(hw)
    for need_two_steps in (True, False):
        for lane_mult in (256, 128):            # prefer multiples of 256 (v6e/v7x MXU width)
            for l in divs:
                if l % lane_mult or l > max_l:
                    continue
                if need_two_steps and n_batch * (hw // l) < 2:
                    continue
                return l
    # No lane-dense divisor (odd spatial size): fall back to the largest divisor that fits,
    # else the whole image per step (masked stores -- correct, just slower).
    for l in divs:
        if l <= max_l:
            return l
    return hw


def input_layer_forward(x_nchw, weight, bias, gamma, beta,
                        running_mean, running_var, eps=1e-5,
                        out_dtype=jnp.bfloat16):
    N, Cin, H, W = x_nchw.shape
    Cout = weight.shape[0]
    K = 4 * Cin
    HW = H * W

    # ---- BN folding (inference mode): y = scale*conv + (beta + (bias - mean)*scale) ----
    scale = (gamma / jnp.sqrt(running_var + eps)).astype(jnp.float32)          # (Cout,)
    shift = (beta + (bias - running_mean) * scale).astype(jnp.float32)
    scale = scale.reshape(Cout, 1)
    shift = shift.reshape(Cout, 1)

    # Conv weights in bf16, contraction index k = (di*2 + dj)*Cin + ci (matches pack below).
    w2 = jnp.transpose(weight, (0, 2, 3, 1)).reshape(Cout, K).astype(jnp.bfloat16)

    # ---- activation pre-pack: cast to bf16 FIRST, then pad/shift/concat (one fused pass) ----
    # PyTorch padding='same' with kernel_size=2 pads bottom/right by one.
    xb = x_nchw.astype(jnp.bfloat16)
    xp = jnp.pad(xb, ((0, 0), (0, 0), (0, 1), (0, 1)))
    taps = [xp[:, :, di:di + H, dj:dj + W] for di in (0, 1) for dj in (0, 1)]
    x_pk = jnp.concatenate(taps, axis=1).reshape(N, K, HW)                     # (N, 4Cin, H*W)

    # ---- tiling of the flattened spatial axis ----
    # Per-lane VMEM bytes: double-buffered bf16 input/output blocks + f32 accumulator.
    bytes_per_lane = 2 * (2 * K) + 2 * (2 * Cout) + 4 * Cout
    L = _pick_spatial_tile(HW, N, bytes_per_lane, _vmem_block_budget())
    n_tiles = pl.cdiv(HW, L)

    block_est = bytes_per_lane * L + 2 * Cout * K + 8 * Cout
    # Headroom over the estimate, capped at 48 MiB (below v7x's 64 MiB physical VMEM/TC).
    vmem_limit = int(min(max(2.5 * block_est, 32 * 1024 * 1024), 48 * 1024 * 1024))

    out_flat = pl.pallas_call(
        input_layer_kernel,
        out_shape=jax.ShapeDtypeStruct((N, Cout, HW), out_dtype),
        grid_spec=pltpu.PrefetchScalarGridSpec(
            num_scalar_prefetch=0,
            grid=(N, n_tiles),
            in_specs=[
                pl.BlockSpec((1, K, L), lambda n, i: (n, 0, i)),
                pl.BlockSpec((Cout, K), lambda n, i: (0, 0)),
                pl.BlockSpec((Cout, 1), lambda n, i: (0, 0)),
                pl.BlockSpec((Cout, 1), lambda n, i: (0, 0)),
            ],
            out_specs=pl.BlockSpec((1, Cout, L), lambda n, i: (n, 0, i)),
        ),
        compiler_params=pltpu.CompilerParams(
            dimension_semantics=("parallel", "parallel"),
            vmem_limit_bytes=vmem_limit,
        ),
    )(x_pk, w2, scale, shift)

    # Metadata-only reshape back to NCHW (no HBM transpose pass on the output).
    return out_flat.reshape(N, Cout, H, W)


def reference(x, weight, bias, gamma, beta, mean, var, eps=1e-5):
    # Pure-JAX (f32) reference of the PyTorch forward (eval-mode BN).
    xp = jnp.pad(x, ((0, 0), (0, 0), (0, 1), (0, 1)))
    y = lax.conv_general_dilated(
        xp, weight, window_strides=(1, 1), padding="VALID",
        dimension_numbers=("NCHW", "OIHW", "NCHW"))
    y = y + bias[None, :, None, None]
    y = gamma[None, :, None, None] * (y - mean[None, :, None, None]) \
        / jnp.sqrt(var[None, :, None, None] + eps) + beta[None, :, None, None]
    return jnp.maximum(y, 0.0)


if __name__ == "__main__":
    key = jax.random.PRNGKey(0)
    N, Cin, H, W, Cout = 2, 4, 16, 16, 8
    k1, k2, k3, k4, k5, k6, k7 = jax.random.split(key, 7)

    x = jax.random.normal(k1, (N, Cin, H, W), jnp.float32)

    # Deterministic synthetic parameters (Conv2d default-style init ranges).
    fan_in = Cin * 2 * 2
    bound = 1.0 / (fan_in ** 0.5)
    weight = jax.random.uniform(k2, (Cout, Cin, 2, 2), jnp.float32, -bound, bound)
    bias = jax.random.uniform(k3, (Cout,), jnp.float32, -bound, bound)
    gamma = 1.0 + 0.1 * jax.random.normal(k4, (Cout,), jnp.float32)
    beta = 0.1 * jax.random.normal(k5, (Cout,), jnp.float32)
    running_mean = 0.1 * jax.random.normal(k6, (Cout,), jnp.float32)
    running_var = 1.0 + 0.1 * jnp.abs(jax.random.normal(k7, (Cout,), jnp.float32))

    fwd = jax.jit(input_layer_forward)
    out = fwd(x, weight, bias, gamma, beta, running_mean, running_var)
    out = jax.block_until_ready(out)

    ref = reference(x, weight, bias, gamma, beta, running_mean, running_var)
    assert out.shape == (N, Cout, H, W), out.shape
    # bf16 activations / weights / output with f32 accumulation -> loosened tolerance.
    err = float(jnp.max(jnp.abs(out.astype(jnp.float32) - ref)))
    assert err < 5e-2, err
    print("KERNEL_OK")
</pallas_src>

<mosaic_0001>
module attributes {stable_mosaic.version = 11 : i64} {
  func.func @input_layer_kernel(%arg0: i32, %arg1: i32, %arg2: memref<1x16x256xbf16, #tpu.memory_space<vmem>>, %arg3: memref<8x16xbf16, #tpu.memory_space<vmem>>, %arg4: memref<8x1xf32, #tpu.memory_space<vmem>>, %arg5: memref<8x1xf32, #tpu.memory_space<vmem>>, %arg6: memref<1x8x256xbf16, #tpu.memory_space<vmem>>) attributes {dimension_semantics = [#tpu.dimension_semantics<parallel>, #tpu.dimension_semantics<parallel>], iteration_bounds = array<i64: 2, 1>, scalar_prefetch = 0 : i64, scratch_operands = 0 : i64, tpu.core_type = #tpu.core_type<tc>, window_params = [{transform_indices = @transform_0, window_bounds = array<i64: 1, 16, 256>}, {pipeline_mode = #tpu.pipeline_mode<synchronous>, transform_indices = @transform_1, window_bounds = array<i64: 8, 16>}, {pipeline_mode = #tpu.pipeline_mode<synchronous>, transform_indices = @transform_2, window_bounds = array<i64: 8, 1>}, {pipeline_mode = #tpu.pipeline_mode<synchronous>, transform_indices = @transform_3, window_bounds = array<i64: 8, 1>}, {transform_indices = @transform_4, window_bounds = array<i64: 1, 8, 256>}]} {
    %c0 = arith.constant 0 : index
    %c0_0 = arith.constant 0 : index
    %0 = vector.load %arg3[%c0, %c0_0] : memref<8x16xbf16, #tpu.memory_space<vmem>>, vector<8x16xbf16>
    %c0_1 = arith.constant 0 : index
    %c0_2 = arith.constant 0 : index
    %c0_3 = arith.constant 0 : index
    %1 = vector.load %arg2[%c0_1, %c0_2, %c0_3] : memref<1x16x256xbf16, #tpu.memory_space<vmem>>, vector<1x16x256xbf16>
    %2 = vector.shape_cast %1 : vector<1x16x256xbf16> to vector<16x256xbf16>
    %cst = arith.constant dense<0.000000e+00> : vector<8x256xf32>
    %3 = tpu.matmul %0, %2, %cst {dimension_numbers = #tpu.dot_dimension_numbers<[1], [0], [0], [1], [0, 0, 1, 1], [], []>} : vector<8x16xbf16>, vector<16x256xbf16>, vector<8x256xf32> -> vector<8x256xf32>
    %c0_4 = arith.constant 0 : index
    %c0_5 = arith.constant 0 : index
    %4 = vector.load %arg4[%c0_4, %c0_5] : memref<8x1xf32, #tpu.memory_space<vmem>>, vector<8x1xf32>
    %5 = vector.broadcast %4 : vector<8x1xf32> to vector<8x256xf32>
    %6 = arith.mulf %3, %5 : vector<8x256xf32>
    %c0_6 = arith.constant 0 : index
    %c0_7 = arith.constant 0 : index
    %7 = vector.load %arg5[%c0_6, %c0_7] : memref<8x1xf32, #tpu.memory_space<vmem>>, vector<8x1xf32>
    %8 = vector.broadcast %7 : vector<8x1xf32> to vector<8x256xf32>
    %9 = arith.addf %6, %8 : vector<8x256xf32>
    %cst_8 = arith.constant 0.000000e+00 : f32
    %10 = vector.broadcast %cst_8 : f32 to vector<8x256xf32>
    %11 = arith.maximumf %9, %10 : vector<8x256xf32>
    %12 = arith.truncf %11 : vector<8x256xf32> to vector<8x256xbf16>
    %c0_9 = arith.constant 0 : index
    %c0_10 = arith.constant 0 : index
    %c0_11 = arith.constant 0 : index
    %13 = vector.load %arg6[%c0_9, %c0_10, %c0_11] : memref<1x8x256xbf16, #tpu.memory_space<vmem>>, vector<1x8x256xbf16>
    %14 = vector.shape_cast %13 : vector<1x8x256xbf16> to vector<8x256xbf16>
    %15 = vector.shape_cast %12 : vector<8x256xbf16> to vector<1x8x256xbf16>
    tpu.vector_store %arg6[%c0_9, %c0_10, %c0_11], %15 {strides = array<i32>} : memref<1x8x256xbf16, #tpu.memory_space<vmem>>, vector<1x8x256xbf16>,
    return
  }
  func.func @transform_0(%arg0: i32, %arg1: i32) -> (i32, i32, i32) {
    %c0_i32 = arith.constant 0 : i32
    %c0_i32_0 = arith.constant 0 : i32
    return %arg0, %c0_i32, %arg1 : i32, i32, i32
  }
  func.func @transform_1(%arg0: i32, %arg1: i32) -> (i32, i32) {
    %c0_i32 = arith.constant 0 : i32
    %c0_i32_0 = arith.constant 0 : i32
    %c0_i32_1 = arith.constant 0 : i32
    return %c0_i32, %c0_i32_0 : i32, i32
  }
  func.func @transform_2(%arg0: i32, %arg1: i32) -> (i32, i32) {
    %c0_i32 = arith.constant 0 : i32
    %c0_i32_0 = arith.constant 0 : i32
    %c0_i32_1 = arith.constant 0 : i32
    return %c0_i32, %c0_i32_0 : i32, i32
  }
  func.func @transform_3(%arg0: i32, %arg1: i32) -> (i32, i32) {
    %c0_i32 = arith.constant 0 : i32
    %c0_i32_0 = arith.constant 0 : i32
    %c0_i32_1 = arith.constant 0 : i32
    return %c0_i32, %c0_i32_0 : i32, i32
  }
  func.func @transform_4(%arg0: i32, %arg1: i32) -> (i32, i32, i32) {
    %c0_i32 = arith.constant 0 : i32
    %c0_i32_0 = arith.constant 0 : i32
    return %arg0, %c0_i32, %arg1 : i32, i32, i32
  }
}

</mosaic_0001>

<llo_original>
// kernel: input_layer_forward.1
$region0: #{input_layer_forward.1}
  #allocation0 [shape = 'u32[]', space=smem, size = 0x4, offset = 0x4, fixed_abs, tag = 'smem constant byte address 0x4 - core index']
  #allocation1 [shape = 'u32[144,128]{1,0:T(1,128)}', space=vmem, size = 0x12000, scoped, tag = 'internal scratch']
  %s0 = inlined_call_operand.vmem [shape: bf16[2,16,256], index: 0, kind: input, shape index: {}]
  %s1 = inlined_call_operand.vmem [shape: bf16[8,16], index: 1, kind: input, shape index: {}]
  %s2 = inlined_call_operand.vmem [shape: f32[8,1], index: 2, kind: input, shape index: {}]
  %s3 = inlined_call_operand.vmem [shape: f32[8,1], index: 3, kind: input, shape index: {}]
  %s4 = inlined_call_operand.vmem [shape: bf16[2,8,256], index: 4, kind: output, shape index: {}]
  %s5 = sld [smem:[#allocation0]]
  $region49: #{input_layer_forward.1} parent=0
    _
  %s7 = ssub.s32 1, %s5
  %s8 = scalar_select 0, %s7, %s5
  loop: start=0, step=1, limit=4
  $region2: #{input_layer_forward.1} parent=0 // loop_pre_header
    _
  $region3: #{input_layer_forward.1} parent=0 // loop_header
    %s10 = sphi 0, %s14
    %p11 = scmp.ge.s32.totalorder %s10, 4
    %s17 = sphi 0, %s29
    %s18 = sphi 0, %s25
    %s19 = sphi 0, %s17
    %s20 = sphi 0, %s18
    %s21 = sphi 0, %s19
    %s22 = sphi 0, %s20
    %s34 = sphi 0, %s36
    %s37 = sphi 0, %s34
    %s38 = sphi 0, %s37
    %s54 = sphi 0, %s38
    %s58 = sphi 0, %s58
    %s60 = sphi 0, %s58
    %s61 = sphi 0, %s60
    %s75 = sphi 0, %s61
    %s79 = sphi 0, %s79
    %s81 = sphi 0, %s79
    %s82 = sphi 0, %s81
    %s96 = sphi 0, %s82
    %s100 = sphi 0, %s100
    %s102 = sphi 0, %s100
    %s103 = sphi 0, %s102
    %s117 = sphi 0, %s103
    %s125 = sphi 0, %s127
    %s128 = sphi 0, %s125
    %s129 = sphi 0, %s128
    %s145 = sphi 0, %s129
  $region4: #{input_layer_forward.1} parent=0 // loop_header_branch
    %13 = sbr.rel (%p11) target = $region8
  $region5: #{input_layer_forward.1} parent=0 // loop_body
    %s15 = ssub.s32 %s10, 1
    %s16 = ssub.s32 %s10, 2
    %s23 = sadd.s32 1, %s18
    %p24 = scmp.ge.s32.totalorder %s23, 1
    %s25 = scalar_select %p24, 0, %s23
    %s26 = sadd.s32 1, %s17
    %s27 = scalar_select %p24, %s26, %s17
    %p28 = scmp.ge.s32.totalorder %s27, 2
    %s29 = scalar_select %p28, 0, %s27
    %s30 = ssub.s32 %s17, %s29
    %s31 = ssub.s32 %s18, %s25
    %s32 = sor.u32 %s30, %s31
    %p33 = scmp.eq.s32.totalorder %s32, 0
    %s35 = sadd.s32 %s34, 1
    %s36 = scalar_select %p33, %s34, %s35
    %p39 = pneg %p33
    %p40 = scmp.eq.s32.totalorder %s10, 1
    %p41 = por %p39, %p40
    %p42 = scmp.ne.s32.totalorder %s34, %s37
    %p43 = scmp.eq.s32.totalorder %s10, 0
    %p44 = por %p42, %p43
    %p45 = scmp.ne.s32.totalorder %s34, %s37
    %p46 = scmp.eq.s32.totalorder %s15, 1
    %p47 = por %p45, %p46
    %p48 = scmp.ne.s32.totalorder %s37, %s38
    %p49 = scmp.eq.s32.totalorder %s15, 0
    %p50 = por %p48, %p49
    %p51 = scmp.ne.s32.totalorder %s37, %s38
    %p52 = scmp.eq.s32.totalorder %s16, 1
    %p53 = por %p51, %p52
    %p55 = scmp.ne.s32.totalorder %s38, %s54
    %p56 = scmp.eq.s32.totalorder %s16, 0
    %p57 = por %p55, %p56
    %s59 = sadd.s32 %s58, 1
    %p62 = scmp.eq.s32.totalorder %s10, 1
    %p63 = scmp.ne.s32.totalorder %s58, %s60
    %p64 = scmp.eq.s32.totalorder %s10, 0
    %p65 = por %p63, %p64
    %p66 = scmp.ne.s32.totalorder %s58, %s60
    %p67 = scmp.eq.s32.totalorder %s15, 1
    %p68 = por %p66, %p67
    %p69 = scmp.ne.s32.totalorder %s60, %s61
    %p70 = scmp.eq.s32.totalorder %s15, 0
    %p71 = por %p69, %p70
    %p72 = scmp.ne.s32.totalorder %s60, %s61
    %p73 = scmp.eq.s32.totalorder %s16, 1
    %p74 = por %p72, %p73
    %p76 = scmp.ne.s32.totalorder %s61, %s75
    %p77 = scmp.eq.s32.totalorder %s16, 0
    %p78 = por %p76, %p77
    %s80 = sadd.s32 %s79, 1
    %p83 = scmp.eq.s32.totalorder %s10, 1
    %p84 = scmp.ne.s32.totalorder %s79, %s81
    %p85 = scmp.eq.s32.totalorder %s10, 0
    %p86 = por %p84, %p85
    %p87 = scmp.ne.s32.totalorder %s79, %s81
    %p88 = scmp.eq.s32.totalorder %s15, 1
    %p89 = por %p87, %p88
    %p90 = scmp.ne.s32.totalorder %s81, %s82
    %p91 = scmp.eq.s32.totalorder %s15, 0
    %p92 = por %p90, %p91
    %p93 = scmp.ne.s32.totalorder %s81, %s82
    %p94 = scmp.eq.s32.totalorder %s16, 1
    %p95 = por %p93, %p94
    %p97 = scmp.ne.s32.totalorder %s82, %s96
    %p98 = scmp.eq.s32.totalorder %s16, 0
    %p99 = por %p97, %p98
    %s101 = sadd.s32 %s100, 1
    %p104 = scmp.eq.s32.totalorder %s10, 1
    %p105 = scmp.ne.s32.totalorder %s100, %s102
    %p106 = scmp.eq.s32.totalorder %s10, 0
    %p107 = por %p105, %p106
    %p108 = scmp.ne.s32.totalorder %s100, %s102
    %p109 = scmp.eq.s32.totalorder %s15, 1
    %p110 = por %p108, %p109
    %p111 = scmp.ne.s32.totalorder %s102, %s103
    %p112 = scmp.eq.s32.totalorder %s15, 0
    %p113 = por %p111, %p112
    %p114 = scmp.ne.s32.totalorder %s102, %s103
    %p115 = scmp.eq.s32.totalorder %s16, 1
    %p116 = por %p114, %p115
    %p118 = scmp.ne.s32.totalorder %s103, %s117
    %p119 = scmp.eq.s32.totalorder %s16, 0
    %p120 = por %p118, %p119
    %s121 = ssub.s32 %s17, %s29
    %s122 = ssub.s32 %s18, %s25
    %s123 = sor.u32 %s121, %s122
    %p124 = scmp.eq.s32.totalorder %s123, 0
    %s126 = sadd.s32 %s125, 1
    %s127 = scalar_select %p124, %s125, %s126
    %p130 = pneg %p124
    %p131 = scmp.eq.s32.totalorder %s10, 1
    %p132 = por %p130, %p131
    %p133 = scmp.ne.s32.totalorder %s125, %s128
    %p134 = scmp.eq.s32.totalorder %s10, 0
    %p135 = por %p133, %p134
    %p136 = scmp.ne.s32.totalorder %s125, %s128
    %p137 = scmp.eq.s32.totalorder %s15, 1
    %p138 = por %p136, %p137
    %p139 = scmp.ne.s32.totalorder %s128, %s129
    %p140 = scmp.eq.s32.totalorder %s15, 0
    %p141 = por %p139, %p140
    %p142 = scmp.ne.s32.totalorder %s128, %s129
    %p143 = scmp.eq.s32.totalorder %s16, 1
    %p144 = por %p142, %p143
    %p146 = scmp.ne.s32.totalorder %s129, %s145
    %p147 = scmp.eq.s32.totalorder %s16, 0
    %p148 = por %p146, %p147
    %p149 = scmp.le.s32.totalorder 1, %s10
    %p150 = scmp.lt.s32.totalorder %s10, 3
    %p151 = pnand %p149, %p150
    %p152 = pneg %p151
    // Predicated region
    $region9: #{input_layer_forward.1} parent=5 // pred_check
      _
    $region10: #{input_layer_forward.1} parent=5 // pred_check_branch
      %154 = sbr.rel (%p151) target = $region12
    $region11: #{input_layer_forward.1} parent=5 // pred_region
      %s155 = ssub.s32 %s10, 1
      // Predicated region
      $region13: #{input_layer_forward.1} parent=11 // pred_check
        %p156 = pneg %p71
      $region14: #{input_layer_forward.1} parent=11 // pred_check_branch
        %158 = sbr.rel (%p156) target = $region16
      $region15: #{input_layer_forward.1} parent=11 // pred_region
        _
      $region16: #{input_layer_forward.1} parent=11 // pred_fallthru
        _
      // Predicated region
      $region17: #{input_layer_forward.1} parent=11 // pred_check
        %p159 = pneg %p92
      $region18: #{input_layer_forward.1} parent=11 // pred_check_branch
        %161 = sbr.rel (%p159) target = $region20
      $region19: #{input_layer_forward.1} parent=11 // pred_region
        _
      $region20: #{input_layer_forward.1} parent=11 // pred_fallthru
        _
      // Predicated region
      $region21: #{input_layer_forward.1} parent=11 // pred_check
        %p162 = pneg %p113
      $region22: #{input_layer_forward.1} parent=11 // pred_check_branch
        %164 = sbr.rel (%p162) target = $region24
      $region23: #{input_layer_forward.1} parent=11 // pred_region
        _
      $region24: #{input_layer_forward.1} parent=11 // pred_fallthru
        _
    $region12: #{input_layer_forward.1} parent=5 // pred_fallthru
      _
    %p165 = scmp.lt.s32.totalorder %s10, 2
    // Predicated region
    $region25: #{input_layer_forward.1} parent=5 // pred_check
      %p166 = pneg %p165
    $region26: #{input_layer_forward.1} parent=5 // pred_check_branch
      %168 = sbr.rel (%p166) target = $region28
    $region27: #{input_layer_forward.1} parent=5 // pred_region
      // Predicated region
      $region29: #{input_layer_forward.1} parent=27 // pred_check
        %p169 = pneg %p44
      $region30: #{input_layer_forward.1} parent=27 // pred_check_branch
        %171 = sbr.rel (%p169) target = $region32
      $region31: #{input_layer_forward.1} parent=27 // pred_region
        %s172 = smul.u32 2, %s18
        %p173 = scmp.lt.s32.totalorder %s17, 1
        %s174 = scalar_select %p173, %s17, 1
        %p175 = scmp.lt.s32.totalorder %s172, 1
        %s176 = scalar_select %p175, %s172, 1
        %s177 = smul.addr %s174, 4
        %s178 = sadd.s32 %s176, %s177
        %s179 = smul.addr %s178, 4
        %s180 = scalar_lea.vmem %s0, %s179
        %s181 = smul.u32 2, %s18
      $region32: #{input_layer_forward.1} parent=27 // pred_fallthru
        _
    $region28: #{input_layer_forward.1} parent=5 // pred_fallthru
      _
    %p182 = scmp.le.s32.totalorder 1, %s10
    %p183 = scmp.lt.s32.totalorder %s10, 3
    %p184 = pnand %p182, %p183
    %p185 = pneg %p184
    // Predicated region
    $region33: #{input_layer_forward.1} parent=5 // pred_check
      _
    $region34: #{input_layer_forward.1} parent=5 // pred_check_branch
      %187 = sbr.rel (%p184) target = $region36
    $region35: #{input_layer_forward.1} parent=5 // pred_region
      %s188 = ssub.s32 %s10, 1
      %s189 = smul.u32 2, %s20
      %p190 = scmp.lt.s32.totalorder %s19, 1
      %s191 = scalar_select %p190, %s19, 1
      %p192 = scmp.lt.s32.totalorder %s189, 1
      %s193 = scalar_select %p192, %s189, 1
      %s194 = smul.addr %s191, 4
      %s195 = sadd.s32 %s193, %s194
      %s196 = smul.addr %s195, 4
      %s197 = scalar_lea.vmem %s0, %s196
      %p198 = pneg %p50
      %p199 = pneg %p47
      %p200 = pneg %p71
      %p201 = pneg %p68
      %p202 = pneg %p92
      %p203 = pneg %p89
      %p204 = pneg %p113
      %p205 = pneg %p110
      %p206 = pneg %p141
      %p207 = pneg %p138
      %s208 = smul.u32 2, %s20
      %p209 = scmp.lt.s32.totalorder %s19, 1
      %s210 = scalar_select %p209, %s19, 1
      %p211 = scmp.lt.s32.totalorder %s208, 1
      %s212 = scalar_select %p211, %s208, 1
      %s213 = smul.addr %s210, 2
      %s214 = sadd.s32 %s212, %s213
      %s215 = smul.addr %s214, 4
      %s216 = scalar_lea.vmem %s4, %s215
      %s217 = smul.u32 2, %s20
      %p218 = scmp.lt.s32.totalorder %s19, 1
      %s219 = scalar_select %p218, %s19, 1
      %p220 = scmp.lt.s32.totalorder %s217, 1
      %s221 = scalar_select %p220, %s217, 1
      %s222 = smul.addr %s219, 4
      %s223 = sadd.s32 %s221, %s222
      %s224 = smul.addr %s223, 4
      %s225 = scalar_lea.vmem %s0, %s224
      %s226 = smul.u32 2, %s20
      %s227 = smul.u32 2, %s20
      %p228 = scmp.lt.s32.totalorder %s19, 1
      %s229 = scalar_select %p228, %s19, 1
      %p230 = scmp.lt.s32.totalorder %s227, 1
      %s231 = scalar_select %p230, %s227, 1
      %s232 = smul.addr %s229, 2
      %s233 = sadd.s32 %s231, %s232
      %s234 = smul.addr %s233, 4
      %s235 = scalar_lea.vmem %s4, %s234
      %s236 = smul.u32 2, %s20
      %v238 = vld [vmem:[%s1] sm:$0xf]
      %v239 = vld [vmem:[%s225] sm:$0xff]
      %v240 = vld [vmem:[%s225 + $0x8] sm:$0xff]
      %v243 = vunpack.c.l.b16 %v239
      %v244 = vunpack.c.h.b16 %v239
      %v245 = vunpack.c.l.b16 %v240
      %v246 = vunpack.c.h.b16 %v240
      %v247 = vpack.c.b16 %v245, %v243
      %v248 = vpack.c.b16 %v246, %v244
      %vm251 = vcmask 130048
      %v253 = vsel %vm251, %v238, 0
      %255 = vmatprep.subr.bf16.mxu0 %v248
      %256 = vmatpush1.bf16.msra.mxu0 %v247
      %257 = vmatprep.subr.bf16.mxu0 0
      %258 = vmatpush1.bf16.msra.mxu0 0
      %259 = vmatprep.subr.bf16.mxu0 0
      %260 = vmatpush1.bf16.msra.mxu0 0
      %261 = vmatprep.subr.bf16.mxu0 0
      %262 = vmatpush1.bf16.msra.mxu0 0
      %263 = vmatprep.subr.bf16.mxu0 0
      %264 = vmatpush1.bf16.msra.mxu0 0
      %265 = vmatprep.subr.bf16.mxu0 0
      %266 = vmatpush1.bf16.msra.mxu0 0
      %267 = vmatprep.subr.bf16.mxu0 0
      %268 = vmatpush1.bf16.msra.mxu0 0
      %269 = vmatprep.subr.bf16.mxu0 0
      %270 = vmatpush1.bf16.msra.mxu0 0
      %271 = vmatprep.subr.bf16.mxu0 0
      %272 = vmatpush1.bf16.msra.mxu0 0
      %273 = vmatprep.subr.bf16.mxu0 0
      %274 = vmatpush1.bf16.msra.mxu0 0
      %275 = vmatprep.subr.bf16.mxu0 0
      %276 = vmatpush1.bf16.msra.mxu0 0
      %277 = vmatprep.subr.bf16.mxu0 0
      %278 = vmatpush1.bf16.msra.mxu0 0
      %279 = vmatprep.subr.bf16.mxu0 0
      %280 = vmatpush1.bf16.msra.mxu0 0
      %281 = vmatprep.subr.bf16.mxu0 0
      %282 = vmatpush1.bf16.msra.mxu0 0
      %283 = vmatprep.subr.bf16.mxu0 0
      %284 = vmatpush1.bf16.msra.mxu0 0
      %285 = vmatprep.subr.bf16.mxu0 0
      %286 = vmatpush1.bf16.msra.mxu0 0
      %287 = vmatprep.mubr.bf16.mxu0 0
      %288 = vmatmul.mubr.bf16.gmra.mrb[0].mxu0 %v253
      %v289 = vpop.f32.mrb[0].mxu0
      %v290 = vadd.f32 0.0, %v289
      %v291 = vpop.f32.mrb[0].mxu0
      %v292 = vadd.f32 0.0, %v291
      %v293 = vpop.f32.mrb[0].mxu0
      %v294 = vpop.f32.mrb[0].mxu0
      %295 = vdwg.mxu0
      %v296 = vld [vmem:[%s2] sm:$0xff]
      %298 = vset.pattern.permute.xlu0 0
      %299 = vperm.xlu0 %298, %v296
      %v300 = vpop.permute.xlu0 %299
      %v302 = vmul.f32 %v290, %v300
      %v303 = vmul.f32 %v292, %v300
      %v304 = vld [vmem:[%s3] sm:$0xff]
      %306 = vset.pattern.permute.xlu0 0
      %307 = vperm.xlu0 %306, %v304
      %v308 = vpop.permute.xlu0 %307
      %v310 = vadd.f32 %v302, %v308
      %v311 = vadd.f32 %v303, %v308
      %v312 = vmax.f32 %v310, 0.0
      %v313 = vmax.f32 %v311, 0.0
      %v314 = vpack.c.bf16 %v312, %v312
      %v315 = vpack.c.bf16 %v313, %v313
      %v318 = vunpack.c.l.b16 %v314
      %v319 = vunpack.c.l.b16 %v315
      %v320 = vpack.c.b16 %v319, %v318
      %322 = vst [vmem:[%s235] sm:$0xff] %v320
      %s323 = smul.u32 2, %s20
      %p324 = scmp.lt.s32.totalorder %s19, 1
      %s325 = scalar_select %p324, %s19, 1
      %p326 = scmp.lt.s32.totalorder %s323, 1
      %s327 = scalar_select %p326, %s323, 1
      %s328 = smul.addr %s325, 2
      %s329 = sadd.s32 %s327, %s328
      %s330 = smul.addr %s329, 4
      %s331 = scalar_lea.vmem %s4, %s330
      // Predicated region
      $region37: #{input_layer_forward.1} parent=35 // pred_check
        %p332 = pneg %p138
      $region38: #{input_layer_forward.1} parent=35 // pred_check_branch
        %334 = sbr.rel (%p332) target = $region40
      $region39: #{input_layer_forward.1} parent=35 // pred_region
        %s335 = smul.u32 2, %s20
      $region40: #{input_layer_forward.1} parent=35 // pred_fallthru
        _
    $region36: #{input_layer_forward.1} parent=5 // pred_fallthru
      _
    %p336 = scmp.le.s32.totalorder 2, %s10
    // Predicated region
    $region41: #{input_layer_forward.1} parent=5 // pred_check
      %p337 = pneg %p336
    $region42: #{input_layer_forward.1} parent=5 // pred_check_branch
      %339 = sbr.rel (%p337) target = $region44
    $region43: #{input_layer_forward.1} parent=5 // pred_region
      %s340 = ssub.s32 %s10, 2
      // Predicated region
      $region45: #{input_layer_forward.1} parent=43 // pred_check
        %p341 = pneg %p144
      $region46: #{input_layer_forward.1} parent=43 // pred_check_branch
        %343 = sbr.rel (%p341) target = $region48
      $region47: #{input_layer_forward.1} parent=43 // pred_region
        %s344 = smul.u32 2, %s22
        %p345 = scmp.lt.s32.totalorder %s21, 1
        %s346 = scalar_select %p345, %s21, 1
        %p347 = scmp.lt.s32.totalorder %s344, 1
        %s348 = scalar_select %p347, %s344, 1
        %s349 = smul.addr %s346, 2
        %s350 = sadd.s32 %s348, %s349
        %s351 = smul.addr %s350, 4
        %s352 = scalar_lea.vmem %s4, %s351
      $region48: #{input_layer_forward.1} parent=43 // pred_fallthru
        _
    $region44: #{input_layer_forward.1} parent=5 // pred_fallthru
      _
  $region6: #{input_layer_forward.1} parent=0 // loop_footer
    %s14 = sadd.s32 1, %s10
  $region7: #{input_layer_forward.1} parent=0 // loop_footer_branch
    %9 = sbr.rel target = $region3
  $region8: #{input_layer_forward.1} parent=0 // loop_exit
    _

</llo_original>
